<compile_context>
chip_gen: v6e
topology: v6e:2x2x1
jax: 0.10.0
libtpu: 0.0.40
codegen_flags: <defaults>
</compile_context>

<pallas_src>
import functools

import jax
import jax.numpy as jnp
from jax.experimental import pallas as pl
from jax.experimental.pallas import tpu as pltpu

_W_NONE = 0           # no class weights
_W_SMEM = 1           # small C: scalar select chain, weights in SMEM
_W_VMEM = 2           # large C: one-hot gather, weights in VMEM
_SMEM_WEIGHT_MAX_C = 32


def _focal_term(logpt, gamma):
    """-(1 - exp(logpt))**gamma * logpt, specialized on the static gamma."""
    if gamma == 0.0:
        return -logpt
    pt = jnp.exp(logpt)
    one_m = 1.0 - pt
    if gamma == 1.0:
        focal = one_m
    elif gamma == 2.0:
        focal = one_m * one_m
    else:
        # generic (possibly fractional) gamma via exp/log on the EUP; base clamped
        # at 0 (reference would give NaN if pt > 1 from fp rounding).
        safe = jnp.maximum(one_m, 1e-30)
        focal = jnp.where(one_m > 0.0,
                          jnp.exp(jnp.float32(gamma) * jnp.log(safe)),
                          0.0)
    return -focal * logpt


def _class_weight(tgt, onehot, w_ref, weight_mode, num_classes):
    """Gather per-position class weight; class axis is axis=1 in both layouts."""
    if weight_mode == _W_SMEM:
        w = jnp.zeros(tgt.shape, jnp.float32)
        for k in range(num_classes):          # C scalar reads from SMEM + VPU selects
            w = jnp.where(tgt == k, w_ref[k], w)
        return w
    # _W_VMEM: one-hot gather (one extra cross-class reduce)
    return jnp.sum(jnp.where(onehot, w_ref[...], 0.0), axis=1, keepdims=True)


# ---------------------------------------------------------------------------
# Kernel A: NCHW / spatial path.  Block (BN, C, TL): classes on sublanes,
# spatial positions on lanes (lane-dense for small C).
# ---------------------------------------------------------------------------
def _focal_nchw_kernel(*refs, gamma, weight_mode, num_classes,
                       n_total, l_total, bn, tl):
    if weight_mode == _W_NONE:
        logits_ref, target_ref, out_ref = refs
        w_ref = None
    else:
        logits_ref, target_ref, w_ref, out_ref = refs

    i = pl.program_id(0)
    j = pl.program_id(1)

    x = logits_ref[...].astype(jnp.float32)                       # (BN, C, TL)
    tgt = target_ref[...]                                         # (BN, 1, TL) int32

    # numerically stable log_softmax along the class (sublane) axis
    m = jnp.max(x, axis=1, keepdims=True)                         # (BN, 1, TL)
    z = x - m
    lse = jnp.log(jnp.sum(jnp.exp(z), axis=1, keepdims=True))     # (BN, 1, TL)
    logp = z - lse                                                # (BN, C, TL)

    cls = jax.lax.broadcasted_iota(jnp.int32, logp.shape, 1)
    onehot = cls == tgt
    logpt = jnp.sum(jnp.where(onehot, logp, 0.0), axis=1, keepdims=True)

    loss = _focal_term(logpt, gamma)                              # (BN, 1, TL)
    if weight_mode != _W_NONE:
        loss = loss * _class_weight(tgt, onehot, w_ref, weight_mode, num_classes)

    need_l = (l_total % tl) != 0      # ragged spatial tail (only possible when bn == 1)
    need_n = (n_total % bn) != 0      # ragged image tail   (only possible when tl == L)

    def _store(mask_n, mask_l):
        v = loss
        if mask_n:
            img = jax.lax.broadcasted_iota(jnp.int32, v.shape, 0)
            v = jnp.where(img + i * bn < n_total, v, 0.0)
        if mask_l:
            lane = jax.lax.broadcasted_iota(jnp.int32, v.shape, 2)
            v = jnp.where(lane + j * tl < l_total, v, 0.0)
        out_ref[...] = jnp.sum(v).reshape(1, 1, 1, 1)

    if (not need_l) and (not need_n):
        _store(False, False)
    elif need_l and not need_n:
        @pl.when(j == pl.num_programs(1) - 1)
        def _():
            _store(False, True)

        @pl.when(j != pl.num_programs(1) - 1)
        def _():
            _store(False, False)
    elif need_n and not need_l:
        @pl.when(i == pl.num_programs(0) - 1)
        def _():
            _store(True, False)

        @pl.when(i != pl.num_programs(0) - 1)
        def _():
            _store(False, False)
    else:
        # not produced by the current tiling logic; mask everywhere as a safe fallback
        _store(True, True)


# ---------------------------------------------------------------------------
# Kernel B: 2-D (rows, C) path, no wrapper transpose.  Block (TR, C): rows on
# sublanes, classes on lanes; reductions run along the lane axis.
# ---------------------------------------------------------------------------
def _focal_rows_kernel(*refs, gamma, weight_mode, num_classes, r_total, tr):
    if weight_mode == _W_NONE:
        logits_ref, target_ref, out_ref = refs
        w_ref = None
    else:
        logits_ref, target_ref, w_ref, out_ref = refs

    i = pl.program_id(0)

    x = logits_ref[...].astype(jnp.float32)                       # (TR, C)
    tgt = target_ref[...]                                         # (TR, 1) int32

    m = jnp.max(x, axis=1, keepdims=True)
    z = x - m
    lse = jnp.log(jnp.sum(jnp.exp(z), axis=1, keepdims=True))
    logp = z - lse                                                # (TR, C)

    cls = jax.lax.broadcasted_iota(jnp.int32, logp.shape, 1)
    onehot = cls == tgt
    logpt = jnp.sum(jnp.where(onehot, logp, 0.0), axis=1, keepdims=True)  # (TR, 1)

    loss = _focal_term(logpt, gamma)
    if weight_mode != _W_NONE:
        loss = loss * _class_weight(tgt, onehot, w_ref, weight_mode, num_classes)

    need_r = (r_total % tr) != 0

    def _store(mask_r):
        v = loss
        if mask_r:
            row = jax.lax.broadcasted_iota(jnp.int32, v.shape, 0)
            v = jnp.where(row + i * tr < r_total, v, 0.0)
        out_ref[...] = jnp.sum(v).reshape(1, 1, 1)

    if not need_r:
        _store(False)
    else:
        @pl.when(i == pl.num_programs(0) - 1)
        def _():
            _store(True)

        @pl.when(i != pl.num_programs(0) - 1)
        def _():
            _store(False)


# ---------------------------------------------------------------------------
# Wrapper
# ---------------------------------------------------------------------------
def _vmem_budget(block_bytes_override):
    """Generation-aware scoped-VMEM limit and per-block byte budget."""
    try:
        cap = int(getattr(pltpu.get_tpu_info(), "vmem_capacity_bytes", 0) or 0)
    except Exception:
        cap = 0
    if cap <= 0:
        cap = 64 * 1024 * 1024                       # conservative default (v7x per-core)
    vmem_limit = min((cap * 3) // 4, 96 * 1024 * 1024)
    if block_bytes_override is not None:
        return vmem_limit, max(1, int(block_bytes_override))
    block_budget = 4 * 1024 * 1024 if cap >= 100 * 1024 * 1024 else 2 * 1024 * 1024
    return vmem_limit, block_budget


def static_focal_loss(logits, target, gamma=0.0, weights=None,
                      size_average=False, block_bytes=None):
    """Pallas implementation of StaticFocalLoss.forward."""
    vmem_limit, budget = _vmem_budget(block_bytes)
    itemsize = jnp.dtype(logits.dtype).itemsize
    has_weights = weights is not None

    if logits.ndim > 2:
        # ----- NCHW path: free (N, C, L) view, lane-dense spatial tiling -----
        n, c = int(logits.shape[0]), int(logits.shape[1])
        l = 1
        for s in logits.shape[2:]:
            l *= int(s)
        rows_total = n * l

        logits3d = logits.reshape(n, c, l)                     # free view of NCHW
        tgt3d = target.reshape(n, 1, l).astype(jnp.int32)

        per_image = c * l * itemsize
        if per_image <= budget:
            tl = l                                             # full spatial extent
            bn = max(1, min(n, budget // per_image))           # fold images per block
        else:
            bn = 1
            lanes = max(128, budget // max(1, c * itemsize))
            tl = max(128, (lanes // 128) * 128)                # 128-lane multiple
            tl = min(tl, l)
        ni = pl.cdiv(n, bn)
        nj = pl.cdiv(l, tl)

        weight_mode = (_W_NONE if not has_weights
                       else _W_SMEM if c <= _SMEM_WEIGHT_MAX_C else _W_VMEM)

        args = [logits3d, tgt3d]
        in_specs = [
            pl.BlockSpec((bn, c, tl), lambda i, j: (i, 0, j)),     # logits, native dtype
            pl.BlockSpec((bn, 1, tl), lambda i, j: (i, 0, j)),     # targets
        ]
        if weight_mode == _W_SMEM:
            args.append(jnp.asarray(weights, jnp.float32).reshape(c))
            in_specs.append(pl.BlockSpec(memory_space=pltpu.MemorySpace.SMEM))
        elif weight_mode == _W_VMEM:
            args.append(jnp.asarray(weights, jnp.float32).reshape(1, c, 1))
            in_specs.append(pl.BlockSpec((1, c, 1), lambda i, j: (0, 0, 0)))

        kernel = functools.partial(
            _focal_nchw_kernel, gamma=float(gamma), weight_mode=weight_mode,
            num_classes=c, n_total=n, l_total=l, bn=bn, tl=tl)

        cost = pl.CostEstimate(
            flops=10 * rows_total * c,
            transcendentals=rows_total * (c + 2),
            bytes_accessed=n * c * l * itemsize + rows_total * 4 + 4 * c + 4 * ni * nj)

        out = pl.pallas_call(
            kernel,
            out_shape=jax.ShapeDtypeStruct((ni, nj, 1, 1), jnp.float32),
            grid=(ni, nj),
            in_specs=in_specs,
            out_specs=pl.BlockSpec((1, 1, 1, 1), lambda i, j: (i, j, 0, 0)),
            compiler_params=pltpu.CompilerParams(
                dimension_semantics=("parallel", "parallel"),
                vmem_limit_bytes=vmem_limit),
            cost_estimate=cost,
        )(*args)
    else:
        # ----- 2-D (rows, C) path: no transpose; rows on sublanes, classes on lanes -----
        r, c = int(logits.shape[0]), int(logits.shape[1])
        rows_total = r
        tgt2d = target.reshape(r, 1).astype(jnp.int32)

        row_bytes = c * itemsize
        if r * row_bytes <= budget:
            tr = r
        else:
            rows = max(8, budget // max(1, row_bytes))
            tr = max(8, (rows // 8) * 8)                       # 8-sublane multiple
            tr = min(tr, r)
        ni = pl.cdiv(r, tr)

        weight_mode = (_W_NONE if not has_weights
                       else _W_SMEM if c <= _SMEM_WEIGHT_MAX_C else _W_VMEM)

        args = [logits, tgt2d]
        in_specs = [
            pl.BlockSpec((tr, c), lambda i: (i, 0)),
            pl.BlockSpec((tr, 1), lambda i: (i, 0)),
        ]
        if weight_mode == _W_SMEM:
            args.append(jnp.asarray(weights, jnp.float32).reshape(c))
            in_specs.append(pl.BlockSpec(memory_space=pltpu.MemorySpace.SMEM))
        elif weight_mode == _W_VMEM:
            args.append(jnp.asarray(weights, jnp.float32).reshape(1, c))
            in_specs.append(pl.BlockSpec((1, c), lambda i: (0, 0)))

        kernel = functools.partial(
            _focal_rows_kernel, gamma=float(gamma), weight_mode=weight_mode,
            num_classes=c, r_total=r, tr=tr)

        cost = pl.CostEstimate(
            flops=10 * rows_total * c,
            transcendentals=rows_total * (c + 2),
            bytes_accessed=r * c * itemsize + r * 4 + 4 * c + 4 * ni)

        out = pl.pallas_call(
            kernel,
            out_shape=jax.ShapeDtypeStruct((ni, 1, 1), jnp.float32),
            grid=(ni,),
            in_specs=in_specs,
            out_specs=pl.BlockSpec((1, 1, 1), lambda i: (i, 0, 0)),
            compiler_params=pltpu.CompilerParams(
                dimension_semantics=("parallel",),
                vmem_limit_bytes=vmem_limit),
            cost_estimate=cost,
        )(*args)

    total = jnp.sum(out)                          # add per-tile partial sums (f32)
    if size_average:
        total = total / jnp.float32(rows_total)
    return total


def ref_focal_loss(logits, target, gamma=0.0, weights=None, size_average=False):
    """Pure-JAX reference matching the PyTorch module."""
    if logits.ndim > 2:
        n, c = logits.shape[0], logits.shape[1]
        logits2d = logits.reshape(n, c, -1).transpose(0, 2, 1).reshape(-1, c)
    else:
        logits2d = logits
    t = target.reshape(-1)
    logp = jax.nn.log_softmax(logits2d.astype(jnp.float32), axis=1)
    logpt = jnp.take_along_axis(logp, t[:, None], axis=1)[:, 0]
    pt = jnp.exp(logpt)
    loss = -((1.0 - pt) ** gamma) * logpt
    if weights is not None:
        loss = loss * jnp.asarray(weights, jnp.float32).reshape(-1)[t]
    return loss.mean() if size_average else loss.sum()


if __name__ == "__main__":
    key = jax.random.PRNGKey(0)
    ks = jax.random.split(key, 10)

    # Case 1/2: NCHW defaults + weighted focal (single big block; both axes parallel).
    N, C, H, W = 2, 4, 16, 16
    logits = jax.random.normal(ks[0], (N, C, H, W), dtype=jnp.float32)
    target = jax.random.randint(ks[1], (N, H, W), 0, C, dtype=jnp.int32)
    class_w = jnp.array([1.0, 0.5, 2.0, 1.5], dtype=jnp.float32)

    out1 = static_focal_loss(logits, target)
    ref1 = ref_focal_loss(logits, target)

    out2 = static_focal_loss(logits, target, gamma=2.0, weights=class_w,
                             size_average=True)
    ref2 = ref_focal_loss(logits, target, gamma=2.0, weights=class_w,
                          size_average=True)

    # Case 3: NCHW bf16, forced small blocks -> multi spatial tile + ragged tail mask.
    H3, W3 = 10, 20
    logits3 = jax.random.normal(ks[2], (N, C, H3, W3), dtype=jnp.bfloat16)
    target3 = jax.random.randint(ks[3], (N, H3, W3), 0, C, dtype=jnp.int32)
    out3 = static_focal_loss(logits3, target3, gamma=2.0, weights=class_w,
                             size_average=True, block_bytes=1024)
    ref3 = ref_focal_loss(logits3, target3, gamma=2.0, weights=class_w,
                          size_average=True)

    # Case 4: NCHW image folding (BN=2) with ragged batch (N=3).
    N4, H4, W4 = 3, 8, 8
    logits4 = jax.random.normal(ks[4], (N4, C, H4, W4), dtype=jnp.float32)
    target4 = jax.random.randint(ks[5], (N4, H4, W4), 0, C, dtype=jnp.int32)
    out4 = static_focal_loss(logits4, target4, gamma=1.0, weights=class_w,
                             block_bytes=2048)
    ref4 = ref_focal_loss(logits4, target4, gamma=1.0, weights=class_w)

    # Case 5: 2-D classification path (no transpose), multi row tile + ragged rows.
    R5, C5 = 300, 10
    logits5 = jax.random.normal(ks[6], (R5, C5), dtype=jnp.float32)
    target5 = jax.random.randint(ks[7], (R5,), 0, C5, dtype=jnp.int32)
    w5 = jnp.linspace(0.5, 1.5, C5, dtype=jnp.float32)
    out5 = static_focal_loss(logits5, target5, gamma=2.0, weights=w5,
                             size_average=True, block_bytes=2048)
    ref5 = ref_focal_loss(logits5, target5, gamma=2.0, weights=w5,
                          size_average=True)

    # Case 6: 2-D path, C > 32 -> VMEM one-hot weight gather, fractional gamma.
    R6, C6 = 64, 40
    logits6 = jax.random.normal(ks[8], (R6, C6), dtype=jnp.float32)
    target6 = jax.random.randint(ks[9], (R6,), 0, C6, dtype=jnp.int32)
    w6 = jnp.linspace(2.0, 0.5, C6, dtype=jnp.float32)
    out6 = static_focal_loss(logits6, target6, gamma=0.5, weights=w6,
                             block_bytes=4096)
    ref6 = ref_focal_loss(logits6, target6, gamma=0.5, weights=w6)

    for o in (out1, out2, out3, out4, out5, out6):
        jax.block_until_ready(o)

    assert jnp.allclose(out1, ref1, rtol=1e-4, atol=1e-3), (out1, ref1)
    assert jnp.allclose(out2, ref2, rtol=1e-4, atol=1e-3), (out2, ref2)
    assert jnp.allclose(out3, ref3, rtol=1e-3, atol=1e-2), (out3, ref3)
    assert jnp.allclose(out4, ref4, rtol=1e-4, atol=1e-3), (out4, ref4)
    assert jnp.allclose(out5, ref5, rtol=1e-4, atol=1e-3), (out5, ref5)
    assert jnp.allclose(out6, ref6, rtol=1e-4, atol=1e-3), (out6, ref6)

    print("KERNEL_OK")
</pallas_src>

<mosaic_0001>
module attributes {stable_mosaic.version = 11 : i64} {
  func.func @_focal_nchw_kernel(%arg0: i32, %arg1: i32, %arg2: memref<2x4x256xf32, #tpu.memory_space<vmem>>, %arg3: memref<2x1x256xi32, #tpu.memory_space<vmem>>, %arg4: memref<1x1x1x1xf32, #tpu.memory_space<vmem>>) attributes {dimension_semantics = [#tpu.dimension_semantics<parallel>, #tpu.dimension_semantics<parallel>], iteration_bounds = array<i64: 1, 1>, scalar_prefetch = 0 : i64, scratch_operands = 0 : i64, tpu.core_type = #tpu.core_type<tc>, window_params = [{transform_indices = @transform_0, window_bounds = array<i64: 2, 4, 256>}, {transform_indices = @transform_1, window_bounds = array<i64: 2, 1, 256>}, {transform_indices = @transform_2, window_bounds = array<i64: 1, 1, 1, 1>}]} {
    %c0 = arith.constant 0 : index
    %c0_0 = arith.constant 0 : index
    %c0_1 = arith.constant 0 : index
    %0 = vector.load %arg2[%c0, %c0_0, %c0_1] : memref<2x4x256xf32, #tpu.memory_space<vmem>>, vector<2x4x256xf32>
    %c0_2 = arith.constant 0 : index
    %c0_3 = arith.constant 0 : index
    %c0_4 = arith.constant 0 : index
    %1 = vector.load %arg3[%c0_2, %c0_3, %c0_4] : memref<2x1x256xi32, #tpu.memory_space<vmem>>, vector<2x1x256xi32>
    %cst = arith.constant dense<0xFF800000> : vector<2x256xf32>
    %2 = vector.multi_reduction <maximumf>, %0, %cst [1] : vector<2x4x256xf32> to vector<2x256xf32>
    %3 = vector.shape_cast %2 : vector<2x256xf32> to vector<2x1x256xf32>
    %4 = vector.broadcast %3 : vector<2x1x256xf32> to vector<2x4x256xf32>
    %5 = arith.subf %0, %4 : vector<2x4x256xf32>
    %6 = math.exp %5 : vector<2x4x256xf32>
    %cst_5 = arith.constant dense<0.000000e+00> : vector<2x256xf32>
    %7 = vector.multi_reduction <add>, %6, %cst_5 [1] : vector<2x4x256xf32> to vector<2x256xf32>
    %8 = vector.shape_cast %7 : vector<2x256xf32> to vector<2x1x256xf32>
    %9 = math.log %8 : vector<2x1x256xf32>
    %10 = vector.broadcast %9 : vector<2x1x256xf32> to vector<2x4x256xf32>
    %11 = arith.subf %5, %10 : vector<2x4x256xf32>
    %12 = tpu.iota {dimensions = array<i32: 1>} : vector<2x4x256xi32>
    %13 = vector.broadcast %1 : vector<2x1x256xi32> to vector<2x4x256xi32>
    %14 = arith.cmpi eq, %12, %13 : vector<2x4x256xi32>
    %cst_6 = arith.constant 0.000000e+00 : f32
    %15 = vector.broadcast %cst_6 : f32 to vector<2x4x256xf32>
    %16 = arith.select %14, %11, %15 : vector<2x4x256xi1>, vector<2x4x256xf32>
    %cst_7 = arith.constant dense<0.000000e+00> : vector<2x256xf32>
    %17 = vector.multi_reduction <add>, %16, %cst_7 [1] : vector<2x4x256xf32> to vector<2x256xf32>
    %18 = vector.shape_cast %17 : vector<2x256xf32> to vector<2x1x256xf32>
    %cst_8 = arith.constant 0.000000e+00 : f32
    %19 = vector.broadcast %cst_8 : f32 to vector<2x1x256xf32>
    %20 = arith.subf %19, %18 : vector<2x1x256xf32>
    %21 = vector.shape_cast %20 : vector<2x1x256xf32> to vector<1x2x1x256xf32>
    %cst_9 = arith.constant dense<0.000000e+00> : vector<1xf32>
    %22 = vector.multi_reduction <add>, %21, %cst_9 [1, 2, 3] : vector<1x2x1x256xf32> to vector<1xf32>
    %23 = vector.shape_cast %22 : vector<1xf32> to vector<1x1x1x1xf32>
    %24 = vector.extract %23[0, 0, 0, 0] : f32 from vector<1x1x1x1xf32>
    %25 = vector.broadcast %24 : f32 to vector<1x1x1x1xf32>
    %c0_10 = arith.constant 0 : index
    %c0_11 = arith.constant 0 : index
    %c0_12 = arith.constant 0 : index
    %c0_13 = arith.constant 0 : index
    %26 = vector.load %arg4[%c0_10, %c0_11, %c0_12, %c0_13] : memref<1x1x1x1xf32, #tpu.memory_space<vmem>>, vector<1x1x1x1xf32>
    tpu.vector_store %arg4[%c0_10, %c0_11, %c0_12, %c0_13], %25 {strides = array<i32>} : memref<1x1x1x1xf32, #tpu.memory_space<vmem>>, vector<1x1x1x1xf32>,
    return
  }
  func.func @transform_0(%arg0: i32, %arg1: i32) -> (i32, i32, i32) {
    %c0_i32 = arith.constant 0 : i32
    %c0_i32_0 = arith.constant 0 : i32
    return %arg0, %c0_i32, %arg1 : i32, i32, i32
  }
  func.func @transform_1(%arg0: i32, %arg1: i32) -> (i32, i32, i32) {
    %c0_i32 = arith.constant 0 : i32
    %c0_i32_0 = arith.constant 0 : i32
    return %arg0, %c0_i32, %arg1 : i32, i32, i32
  }
  func.func @transform_2(%arg0: i32, %arg1: i32) -> (i32, i32, i32, i32) {
    %c0_i32 = arith.constant 0 : i32
    %c0_i32_0 = arith.constant 0 : i32
    %c0_i32_1 = arith.constant 0 : i32
    return %arg0, %arg1, %c0_i32, %c0_i32_0 : i32, i32, i32, i32
  }
}

</mosaic_0001>

<llo_original>
// kernel: tpu_custom_call.1
$region0: #{tpu_custom_call.1}
  #allocation0 [shape = 'u32[]', space=smem, size = 0x4, offset = 0x4, fixed_abs, tag = 'smem constant byte address 0x4 - core index']
  #allocation1 [shape = 'u32[144,128]{1,0:T(1,128)}', space=vmem, size = 0x12000, scoped, tag = 'internal scratch']
  %s0 = inlined_call_operand.hbm [shape: f32[2,4,256], index: 0, kind: input, shape index: {}]
  %s1 = inlined_call_operand.hbm [shape: s32[2,1,256], index: 1, kind: input, shape index: {}]
  %s2 = inlined_call_operand.hbm [shape: f32[1,1,1,1], index: 2, kind: output, shape index: {}]
  %s3 = sld [smem:[#allocation0]]
  $region26: #{tpu_custom_call.1} parent=0
    _
  %s5 = ssub.s32 1, %s3
  %s6 = scalar_select 0, %s5, %s3
  $region1: #{tpu_custom_call.1} parent=0
    #allocation2 [shape = 'u8[8192]{0}', space=vmem, size = 0x2000, scoped, tag = 'input window, operand 0, single buffered']
    #allocation3 [shape = 's32[1]{0}', space=sflag, size = 0x4, scoped, tag = 'scoped memory for tpu_custom_call.1']
    #allocation4 [shape = 's32[1]{0}', space=sflag, size = 0x4, scoped, tag = 'scoped memory for tpu_custom_call.1']
    #allocation5 [shape = 'u8[2048]{0}', space=vmem, size = 0x800, scoped, tag = 'input window, operand 1, single buffered']
    #allocation6 [shape = 's32[1]{0}', space=sflag, size = 0x4, scoped, tag = 'scoped memory for tpu_custom_call.1']
    #allocation7 [shape = 'u8[512]{0}', space=vmem, size = 0x400, scoped, tag = 'output window, operand 0, single buffered']
    %7 = vsyncpa [#allocation3], 0
    %8 = vsyncpa [#allocation6], 0
    %9 = vsyncpa [#allocation4], 0
    // Predicated region
    $region2: #{tpu_custom_call.1} parent=1 // pred_check
      _
    $region3: #{tpu_custom_call.1} parent=1 // pred_check_branch
      %11 = sbr.rel (0) target = $region5
    $region4: #{tpu_custom_call.1} parent=1 // pred_region
      %s13 = ssub.s32 256, 256
      %14 = vsyncadd [#allocation3], %s13
      %s15 = sshll.u32 [#allocation2], 4
      %s16 = int_to_ptr.vmem [resolvable:$true] %s15
      %21 = dma.hbm_to_vmem [thread:$0]  %s0, 256, %s16, [#allocation3], 128, 128, 8
    $region5: #{tpu_custom_call.1} parent=1 // pred_fallthru
      _
    // Predicated region
    $region6: #{tpu_custom_call.1} parent=1 // pred_check
      _
    $region7: #{tpu_custom_call.1} parent=1 // pred_check_branch
      %23 = sbr.rel (0) target = $region9
    $region8: #{tpu_custom_call.1} parent=1 // pred_region
      %s25 = ssub.s32 64, 64
      %26 = vsyncadd [#allocation6], %s25
      %s27 = sshll.u32 [#allocation5], 4
      %s28 = int_to_ptr.vmem [resolvable:$true] %s27
      %33 = dma.hbm_to_vmem [thread:$0]  %s1, 64, %s28, [#allocation6], 32, 32, 2
    $region9: #{tpu_custom_call.1} parent=1 // pred_fallthru
      _
    // Predicated region
    $region10: #{tpu_custom_call.1} parent=1 // pred_check
      _
    $region11: #{tpu_custom_call.1} parent=1 // pred_check_branch
      %35 = sbr.rel (0) target = $region13
    $region12: #{tpu_custom_call.1} parent=1 // pred_region
      %36 = dma.done [#allocation3], 256
    $region13: #{tpu_custom_call.1} parent=1 // pred_fallthru
      _
    // Predicated region
    $region14: #{tpu_custom_call.1} parent=1 // pred_check
      _
    $region15: #{tpu_custom_call.1} parent=1 // pred_check_branch
      %38 = sbr.rel (0) target = $region17
    $region16: #{tpu_custom_call.1} parent=1 // pred_region
      %39 = dma.done [#allocation6], 64
    $region17: #{tpu_custom_call.1} parent=1 // pred_fallthru
      _
    %v40 = vld [vmem:[#allocation2] sm:$0xff]
    %v41 = vld [vmem:[#allocation2 + $0x8] sm:$0xff]
    %v42 = vld [vmem:[#allocation5] sm:$0x3]
    %v43 = vld [vmem:[#allocation5 + $0x2] sm:$0x3]
    %v46 = vcombine.high %v40, %v40
    %v47 = vcombine.high %v41, %v41
    %vm50 = vcmask 1043456
    %v51 = vsel %vm50, %v40, -inf
    %v52 = vrot.slane %v51, 4
    %v53 = vmax.f32 %v51, %v52
    %v54 = vrot.slane %v53, 2
    %v55 = vmax.f32 %v53, %v54
    %v56 = vrot.slane %v55, 1
    %v57 = vmax.f32 %v55, %v56
    %v58 = vsel %vm50, %v46, -inf
    %v59 = vrot.slane %v58, 4
    %v60 = vmax.f32 %v58, %v59
    %v61 = vrot.slane %v60, 2
    %v62 = vmax.f32 %v60, %v61
    %v63 = vrot.slane %v62, 1
    %v64 = vmax.f32 %v62, %v63
    %v65 = vsel %vm50, %v41, -inf
    %v66 = vrot.slane %v65, 4
    %v67 = vmax.f32 %v65, %v66
    %v68 = vrot.slane %v67, 2
    %v69 = vmax.f32 %v67, %v68
    %v70 = vrot.slane %v69, 1
    %v71 = vmax.f32 %v69, %v70
    %v72 = vsel %vm50, %v47, -inf
    %v73 = vrot.slane %v72, 4
    %v74 = vmax.f32 %v72, %v73
    %v75 = vrot.slane %v74, 2
    %v76 = vmax.f32 %v74, %v75
    %v77 = vrot.slane %v76, 1
    %v78 = vmax.f32 %v76, %v77
    %v83 = vcombine.low %v57, %v64
    %v84 = vcombine.low %v71, %v78
    %v87 = vsub.f32 %v40, %v83
    %v88 = vsub.f32 %v41, %v84
    %v89 = vmul.f32 %v87, 1.442695
    %v90 = vpow.pop %v89
    %v91 = vmul.f32 %v88, 1.442695
    %v92 = vpow.pop %v91
    %v95 = vcombine.high %v90, %v90
    %v96 = vcombine.high %v92, %v92
    %v99 = vsel %vm50, %v90, 0.0
    %v100 = vrot.slane %v99, 4
    %v101 = vadd.f32 %v99, %v100
    %v102 = vrot.slane %v101, 2
    %v103 = vadd.f32 %v101, %v102
    %v104 = vrot.slane %v103, 1
    %v105 = vadd.f32 %v103, %v104
    %v106 = vsel %vm50, %v95, 0.0
    %v107 = vrot.slane %v106, 4
    %v108 = vadd.f32 %v106, %v107
    %v109 = vrot.slane %v108, 2
    %v110 = vadd.f32 %v108, %v109
    %v111 = vrot.slane %v110, 1
    %v112 = vadd.f32 %v110, %v111
    %v113 = vsel %vm50, %v92, 0.0
    %v114 = vrot.slane %v113, 4
    %v115 = vadd.f32 %v113, %v114
    %v116 = vrot.slane %v115, 2
    %v117 = vadd.f32 %v115, %v116
    %v118 = vrot.slane %v117, 1
    %v119 = vadd.f32 %v117, %v118
    %v120 = vsel %vm50, %v96, 0.0
    %v121 = vrot.slane %v120, 4
    %v122 = vadd.f32 %v120, %v121
    %v123 = vrot.slane %v122, 2
    %v124 = vadd.f32 %v122, %v123
    %v125 = vrot.slane %v124, 1
    %v126 = vadd.f32 %v124, %v125
    %v127 = vlog2.pop %v105
    %v128 = vmul.f32 %v127, 0.6931472
    %v129 = vlog2.pop %v112
    %v130 = vmul.f32 %v129, 0.6931472
    %v131 = vlog2.pop %v119
    %v132 = vmul.f32 %v131, 0.6931472
    %v133 = vlog2.pop %v126
    %v134 = vmul.f32 %v133, 0.6931472
    %v139 = vcombine.low %v128, %v130
    %v140 = vcombine.low %v132, %v134
    %v143 = vsub.f32 %v87, %v139
    %v144 = vsub.f32 %v88, %v140
    %v145 = vlaneseq
    %v146 = vshrl.u32 %v145, 7
    %v147 = vlaneseq
    %v148 = vshrl.u32 %v147, 7
    %v149 = vsub.s32 0, %v148
    %v150 = vrot.slane %v42, %v149
    %v151 = vlaneseq
    %v152 = vshrl.u32 %v151, 7
    %v153 = vsub.s32 1, %v152
    %v154 = vrot.slane %v42, %v153
    %v155 = vlaneseq
    %v156 = vshrl.u32 %v155, 7
    %v157 = vsub.s32 0, %v156
    %v158 = vrot.slane %v43, %v157
    %v159 = vlaneseq
    %v160 = vshrl.u32 %v159, 7
    %v161 = vsub.s32 1, %v160
    %v162 = vrot.slane %v43, %v161
    %vm163 = vcmp.eq.s32.totalorder %v146, %v150
    %vm164 = vcmp.eq.s32.totalorder %v146, %v154
    %vm165 = vcmp.eq.s32.totalorder %v146, %v158
    %vm166 = vcmp.eq.s32.totalorder %v146, %v162
    %v169 = vcombine.high %v143, %v143
    %v170 = vcombine.high %v144, %v144
    %v173 = vsel %vm163, %v143, 0.0
    %v174 = vsel %vm164, %v169, 0.0
    %v175 = vsel %vm165, %v144, 0.0
    %v176 = vsel %vm166, %v170, 0.0
    %v177 = vsel %vm50, %v173, 0.0
    %v178 = vrot.slane %v177, 4
    %v179 = vadd.f32 %v177, %v178
    %v180 = vrot.slane %v179, 2
    %v181 = vadd.f32 %v179, %v180
    %v182 = vrot.slane %v181, 1
    %v183 = vadd.f32 %v181, %v182
    %v184 = vsel %vm50, %v174, 0.0
    %v185 = vrot.slane %v184, 4
    %v186 = vadd.f32 %v184, %v185
    %v187 = vrot.slane %v186, 2
    %v188 = vadd.f32 %v186, %v187
    %v189 = vrot.slane %v188, 1
    %v190 = vadd.f32 %v188, %v189
    %v191 = vsel %vm50, %v175, 0.0
    %v192 = vrot.slane %v191, 4
    %v193 = vadd.f32 %v191, %v192
    %v194 = vrot.slane %v193, 2
    %v195 = vadd.f32 %v193, %v194
    %v196 = vrot.slane %v195, 1
    %v197 = vadd.f32 %v195, %v196
    %v198 = vsel %vm50, %v176, 0.0
    %v199 = vrot.slane %v198, 4
    %v200 = vadd.f32 %v198, %v199
    %v201 = vrot.slane %v200, 2
    %v202 = vadd.f32 %v200, %v201
    %v203 = vrot.slane %v202, 1
    %v204 = vadd.f32 %v202, %v203
    %v205 = vsub.f32 0.0, %v183
    %v206 = vsub.f32 0.0, %v190
    %v207 = vsub.f32 0.0, %v197
    %v208 = vsub.f32 0.0, %v204
    %vm209 = vcmask 1040384
    %v210 = vsel %vm209, %v205, 0.0
    %v211 = vsel %vm209, %v206, 0.0
    %v212 = vadd.f32 %v210, %v211
    %v213 = vsel %vm209, %v207, 0.0
    %v214 = vadd.f32 %v212, %v213
    %v215 = vsel %vm209, %v208, 0.0
    %v216 = vadd.f32 %v214, %v215
    %217 = vadd.xlane.f32.xlu0 %v216
    %v218 = vpop.xlane.xlu0 %217
    %v219 = vrot.slane %v218, 4
    %v220 = vadd.f32 %v218, %v219
    %v221 = vrot.slane %v220, 2
    %v222 = vadd.f32 %v220, %v221
    %v223 = vrot.slane %v222, 1
    %v224 = vadd.f32 %v222, %v223
    %s225 = vtos %v224
    %v226 = vstv %s225
    %vm227 = vcmask 0
    %228 = vst.msk [vmem:[#allocation7] sm:$0x1] %vm227, %v226
    // Predicated region
    $region18: #{tpu_custom_call.1} parent=1 // pred_check
      _
    $region19: #{tpu_custom_call.1} parent=1 // pred_check_branch
      %230 = sbr.rel (0) target = $region21
    $region20: #{tpu_custom_call.1} parent=1 // pred_region
      %s232 = ssub.s32 16, 16
      %233 = vsyncadd [#allocation4], %s232
      %s235 = sshll.u32 [#allocation7], 4
      %s236 = int_to_ptr.vmem [resolvable:$true] %s235
      %238 = dma.vmem_to_hbm [thread:$0]  %s236, 16, %s2, [#allocation4]
    $region21: #{tpu_custom_call.1} parent=1 // pred_fallthru
      _
    // Predicated region
    $region22: #{tpu_custom_call.1} parent=1 // pred_check
      _
    $region23: #{tpu_custom_call.1} parent=1 // pred_check_branch
      %240 = sbr.rel (0) target = $region25
    $region24: #{tpu_custom_call.1} parent=1 // pred_region
      %241 = dma.done [#allocation4], 16
    $region25: #{tpu_custom_call.1} parent=1 // pred_fallthru
      _
    %242 = vsyncpa [#allocation3], 1
    %243 = vsyncpa [#allocation6], 1
    %244 = vsyncpa [#allocation4], 1

</llo_original>
